<compile_context>
chip_gen: v7x
topology: tpu7x:2x2x1
jax: 0.10.0
libtpu: 0.0.40
codegen_flags: <defaults>
</compile_context>

<pallas_src>
import jax
import jax.numpy as jnp
from jax.experimental import pallas as pl
from jax.experimental.pallas import tpu as pltpu

# ---------------- model hyper-parameters (small, consistent with the module) ----
VOCAB = 24
EMBED = 32            # default_token_embeddings.shape[1]
HIDDEN_SIZES = [32, 32]
RNN_HIDDEN = HIDDEN_SIZES[0]
OUTPUT_SIZE = 16
BATCH = 8
SEQ = 8
LN_EPS = 1e-5         # nn.LayerNorm default
LANES = 128

# ---- packed parameter slab layout (all row offsets are multiples of 8) ----------
V_PAD = 32                                  # proj_table padded to 32 rows
PROJ_R0 = 0                                 # rows   0: 32  proj_table (bias folded)
WHH_R0 = PROJ_R0 + V_PAD                    # rows  32: 64  w_hh^T
W1_R0 = WHH_R0 + RNN_HIDDEN                 # rows  64: 96  w1^T
W2_R0 = W1_R0 + HIDDEN_SIZES[0]             # rows  96:128  w2^T
WOUT_R0 = W2_R0 + HIDDEN_SIZES[1]           # rows 128:160  w_out^T (zero-padded to 128 lanes)
VEC_R0 = WOUT_R0 + HIDDEN_SIZES[1]          # rows 160:168  b1,g1,be1,b2,g2,be2,b_out,0
SLAB_ROWS = VEC_R0 + 8                      # 168


def _layer_norm_fast(x, gamma, beta, eps=LN_EPS):
    # mean and E[x^2] are independent lane reductions -> can overlap on the XLU.
    mean = jnp.mean(x, axis=-1, keepdims=True)
    mean_sq = jnp.mean(x * x, axis=-1, keepdims=True)
    var = mean_sq - mean * mean
    return (x - mean) * jax.lax.rsqrt(var + eps) * gamma + beta


def rnn_tower_kernel(seq_ref,    # (T*B, 1) int32, time-major (row = t*B + b)
                     slab_ref,   # (SLAB_ROWS, 128) f32 packed parameters
                     out_ref):   # (B, 128) f32, real values in lanes [:OUTPUT_SIZE]
    TB = seq_ref.shape[0]
    B = out_ref.shape[0]
    T = TB // B
    H = RNN_HIDDEN

    # ---- fused embedding lookup + hoisted input projection (one MXU matmul) -----
    # pre_x[t*B + b] = emb[seq[b,t]] @ w_ih^T + b_ih + b_hh
    #               = one_hot(seq) @ proj_table   (bias pre-folded into every row).
    # Token ids assumed in [0, VOCAB); OOB ids hit a zero row.
    vocab_ids = jax.lax.broadcasted_iota(jnp.int32, (TB, V_PAD), 1)       # (TB, 32)
    onehot = (vocab_ids == seq_ref[...]).astype(jnp.float32)              # (TB, 32)
    pre_x = jnp.dot(onehot, slab_ref[PROJ_R0:PROJ_R0 + V_PAD, 0:H],
                    preferred_element_type=jnp.float32)                   # (TB, H)

    # ---- tanh RNN recurrence, h_0 = 0, fully unrolled (T = 8 static) ------------
    w_hh_t = slab_ref[WHH_R0:WHH_R0 + H, 0:H]                             # (H, H)
    h = jnp.zeros((B, H), dtype=jnp.float32)
    for t in range(T):                               # static sublane slices only
        h = jnp.tanh(pre_x[t * B:(t + 1) * B, :]
                     + jnp.dot(h, w_hh_t, preferred_element_type=jnp.float32))
    # Perf note (v6e/v7x): holding w_hh in MXU weight regs across the 8 steps via
    # pltpu.matmul_push_rhs / matmul_acc_lhs / matmul_pop would trim per-step fill
    # latency on this serial chain; kept on jnp.dot for portability/correctness.

    # ---- hidden layer 1: Linear -> ReLU -> dropout(identity @ eval) -> LayerNorm
    x = (jnp.dot(h, slab_ref[W1_R0:W1_R0 + H, 0:H],
                 preferred_element_type=jnp.float32)
         + slab_ref[VEC_R0 + 0:VEC_R0 + 1, 0:H])
    x = jnp.maximum(x, 0.0)
    x = _layer_norm_fast(x, slab_ref[VEC_R0 + 1:VEC_R0 + 2, 0:H],
                         slab_ref[VEC_R0 + 2:VEC_R0 + 3, 0:H])

    # ---- hidden layer 2 ----------------------------------------------------------
    x = (jnp.dot(x, slab_ref[W2_R0:W2_R0 + H, 0:H],
                 preferred_element_type=jnp.float32)
         + slab_ref[VEC_R0 + 3:VEC_R0 + 4, 0:H])
    x = jnp.maximum(x, 0.0)
    x = _layer_norm_fast(x, slab_ref[VEC_R0 + 4:VEC_R0 + 5, 0:H],
                         slab_ref[VEC_R0 + 5:VEC_R0 + 6, 0:H])

    # ---- output linear: lane-dense (B, 128) unmasked store -----------------------
    out_ref[...] = (jnp.dot(x, slab_ref[WOUT_R0:WOUT_R0 + H, :],
                            preferred_element_type=jnp.float32)
                    + slab_ref[VEC_R0 + 6:VEC_R0 + 7, :])


def _pad2d(x, rows, cols):
    r, c = x.shape
    return jnp.pad(x, ((0, rows - r), (0, cols - c)))


def rnn_tower_forward(sequences, params):
    """sequences: (B, T) int32 token ids in [0, VOCAB).  Returns (B, OUTPUT_SIZE)."""
    B, T = sequences.shape
    H = RNN_HIDDEN

    # --- trace-time parameter prep (fused under jit, parameter-only) -------------
    # proj_table rows: emb[v] @ w_ih^T + b_ih + b_hh  (valid fold: each in-range
    # token contributes exactly one one-hot `1` per time step).
    proj = (params["embeddings"] @ params["w_ih"].T
            + params["b_ih"] + params["b_hh"])                       # (VOCAB, H)

    vec = jnp.zeros((8, LANES), jnp.float32)
    vec = vec.at[0, :H].set(params["b1"][0])
    vec = vec.at[1, :H].set(params["g1"][0])
    vec = vec.at[2, :H].set(params["be1"][0])
    vec = vec.at[3, :H].set(params["b2"][0])
    vec = vec.at[4, :H].set(params["g2"][0])
    vec = vec.at[5, :H].set(params["be2"][0])
    vec = vec.at[6, :OUTPUT_SIZE].set(params["b_out"][0])

    slab = jnp.concatenate([
        _pad2d(proj, V_PAD, LANES),                  # rows   0: 32
        _pad2d(params["w_hh"].T, H, LANES),          # rows  32: 64
        _pad2d(params["w1"].T, H, LANES),            # rows  64: 96
        _pad2d(params["w2"].T, H, LANES),            # rows  96:128
        _pad2d(params["w_out"].T, H, LANES),         # rows 128:160 (zero-padded lanes)
        vec,                                         # rows 160:168
    ], axis=0).astype(jnp.float32)                   # (168, 128)

    # time-major token ids: row = t*B + b (tiny int op, trace-time)
    seq_tm = jnp.transpose(sequences, (1, 0)).reshape(T * B, 1).astype(jnp.int32)

    vmem = pl.BlockSpec(memory_space=pltpu.MemorySpace.VMEM)
    out_padded = pl.pallas_call(
        rnn_tower_kernel,
        out_shape=jax.ShapeDtypeStruct((B, LANES), jnp.float32),    # lane-dense output
        in_specs=[vmem, vmem],
        out_specs=vmem,
    )(seq_tm, slab)

    return out_padded[:, :OUTPUT_SIZE]


# ---------------- deterministic parameter init (synthetic, no checkpoint) -------
def init_params(key):
    ks = jax.random.split(key, 10)
    scale = 0.1
    return {
        "embeddings": jax.random.normal(ks[0], (VOCAB, EMBED), jnp.float32),
        # nn.RNN weights
        "w_ih": jax.random.normal(ks[1], (RNN_HIDDEN, EMBED), jnp.float32) * scale,
        "w_hh": jax.random.normal(ks[2], (RNN_HIDDEN, RNN_HIDDEN), jnp.float32) * scale,
        "b_ih": jax.random.normal(ks[3], (1, RNN_HIDDEN), jnp.float32) * scale,
        "b_hh": jax.random.normal(ks[4], (1, RNN_HIDDEN), jnp.float32) * scale,
        # HiddenLayer 1 (Linear H0->H0 + LayerNorm)
        "w1": jax.random.normal(ks[5], (HIDDEN_SIZES[0], RNN_HIDDEN), jnp.float32) * scale,
        "b1": jnp.zeros((1, HIDDEN_SIZES[0]), jnp.float32),
        "g1": jnp.ones((1, HIDDEN_SIZES[0]), jnp.float32),
        "be1": jnp.zeros((1, HIDDEN_SIZES[0]), jnp.float32),
        # HiddenLayer 2 (Linear H0->H1 + LayerNorm)
        "w2": jax.random.normal(ks[6], (HIDDEN_SIZES[1], HIDDEN_SIZES[0]), jnp.float32) * scale,
        "b2": jnp.zeros((1, HIDDEN_SIZES[1]), jnp.float32),
        "g2": jnp.ones((1, HIDDEN_SIZES[1]), jnp.float32),
        "be2": jnp.zeros((1, HIDDEN_SIZES[1]), jnp.float32),
        # output Linear H1 -> OUTPUT_SIZE
        "w_out": jax.random.normal(ks[7], (OUTPUT_SIZE, HIDDEN_SIZES[1]), jnp.float32) * scale,
        "b_out": jax.random.normal(ks[8], (1, OUTPUT_SIZE), jnp.float32) * scale,
    }


# ---------------- pure-JAX reference (PyTorch semantics) for correctness check --
def _layer_norm_ref(x, gamma, beta, eps=LN_EPS):
    mean = jnp.mean(x, axis=-1, keepdims=True)
    var = jnp.mean((x - mean) ** 2, axis=-1, keepdims=True)
    return (x - mean) * jax.lax.rsqrt(var + eps) * gamma + beta


def reference_forward(sequences, p):
    emb = p["embeddings"][sequences]                      # (B, T, E)
    B, T, _ = emb.shape
    h = jnp.zeros((B, RNN_HIDDEN), jnp.float32)
    for t in range(T):
        h = jnp.tanh(emb[:, t, :] @ p["w_ih"].T + p["b_ih"]
                     + h @ p["w_hh"].T + p["b_hh"])
    x = jnp.maximum(h @ p["w1"].T + p["b1"], 0.0)
    x = _layer_norm_ref(x, p["g1"], p["be1"])
    x = jnp.maximum(x @ p["w2"].T + p["b2"], 0.0)
    x = _layer_norm_ref(x, p["g2"], p["be2"])
    return x @ p["w_out"].T + p["b_out"]


if __name__ == "__main__":
    key = jax.random.PRNGKey(0)
    pkey, skey = jax.random.split(key)
    params = init_params(pkey)
    sequences = jax.random.randint(skey, (BATCH, SEQ), 0, VOCAB, dtype=jnp.int32)

    fwd = jax.jit(rnn_tower_forward)      # fuses the tiny trace-time param packing
    out = jax.block_until_ready(fwd(sequences, params))

    ref = reference_forward(sequences, params)
    assert out.shape == (BATCH, OUTPUT_SIZE)
    assert jnp.allclose(out, ref, rtol=1e-3, atol=1e-3), "mismatch vs reference"

    print("KERNEL_OK")
</pallas_src>

<mosaic_0001>
module attributes {stable_mosaic.version = 11 : i64} {
  func.func @rnn_tower_kernel(%arg0: memref<64x1xi32, #tpu.memory_space<vmem>>, %arg1: memref<168x128xf32, #tpu.memory_space<vmem>>, %arg2: memref<8x128xf32, #tpu.memory_space<vmem>>) attributes {dimension_semantics = [], scalar_prefetch = 0 : i64, scratch_operands = 0 : i64, tpu.core_type = #tpu.core_type<tc>} {
    %0 = tpu.iota {dimensions = array<i32: 1>} : vector<64x32xi32>
    %c0 = arith.constant 0 : index
    %c0_0 = arith.constant 0 : index
    %1 = vector.load %arg0[%c0, %c0_0] : memref<64x1xi32, #tpu.memory_space<vmem>>, vector<64x1xi32>
    %2 = vector.broadcast %1 : vector<64x1xi32> to vector<64x32xi32>
    %3 = arith.cmpi eq, %0, %2 : vector<64x32xi32>
    %4 = arith.extui %3 : vector<64x32xi1> to vector<64x32xi32>
    %5 = arith.sitofp %4 : vector<64x32xi32> to vector<64x32xf32>
    %c0_1 = arith.constant 0 : index
    %c0_2 = arith.constant 0 : index
    %6 = vector.load %arg1[%c0_1, %c0_2] : memref<168x128xf32, #tpu.memory_space<vmem>>, vector<32x32xf32>
    %cst = arith.constant dense<0.000000e+00> : vector<64x32xf32>
    %7 = tpu.matmul %5, %6, %cst {dimension_numbers = #tpu.dot_dimension_numbers<[1], [0], [0], [1], [0, 0, 1, 1], [], []>} : vector<64x32xf32>, vector<32x32xf32>, vector<64x32xf32> -> vector<64x32xf32>
    %c32 = arith.constant 32 : index
    %c0_3 = arith.constant 0 : index
    %8 = vector.load %arg1[%c32, %c0_3] : memref<168x128xf32, #tpu.memory_space<vmem>>, vector<32x32xf32>
    %cst_4 = arith.constant 0.000000e+00 : f32
    %9 = vector.broadcast %cst_4 : f32 to vector<8x32xf32>
    %10 = vector.extract_strided_slice %7 {offsets = [0, 0], sizes = [8, 32], strides = [1, 1]} : vector<64x32xf32> to vector<8x32xf32>
    %cst_5 = arith.constant dense<0.000000e+00> : vector<8x32xf32>
    %11 = tpu.matmul %9, %8, %cst_5 {dimension_numbers = #tpu.dot_dimension_numbers<[1], [0], [0], [1], [0, 0, 1, 1], [], []>} : vector<8x32xf32>, vector<32x32xf32>, vector<8x32xf32> -> vector<8x32xf32>
    %12 = arith.addf %10, %11 : vector<8x32xf32>
    %13 = math.tanh %12 : vector<8x32xf32>
    %14 = vector.extract_strided_slice %7 {offsets = [8, 0], sizes = [8, 32], strides = [1, 1]} : vector<64x32xf32> to vector<8x32xf32>
    %cst_6 = arith.constant dense<0.000000e+00> : vector<8x32xf32>
    %15 = tpu.matmul %13, %8, %cst_6 {dimension_numbers = #tpu.dot_dimension_numbers<[1], [0], [0], [1], [0, 0, 1, 1], [], []>} : vector<8x32xf32>, vector<32x32xf32>, vector<8x32xf32> -> vector<8x32xf32>
    %16 = arith.addf %14, %15 : vector<8x32xf32>
    %17 = math.tanh %16 : vector<8x32xf32>
    %18 = vector.extract_strided_slice %7 {offsets = [16, 0], sizes = [8, 32], strides = [1, 1]} : vector<64x32xf32> to vector<8x32xf32>
    %cst_7 = arith.constant dense<0.000000e+00> : vector<8x32xf32>
    %19 = tpu.matmul %17, %8, %cst_7 {dimension_numbers = #tpu.dot_dimension_numbers<[1], [0], [0], [1], [0, 0, 1, 1], [], []>} : vector<8x32xf32>, vector<32x32xf32>, vector<8x32xf32> -> vector<8x32xf32>
    %20 = arith.addf %18, %19 : vector<8x32xf32>
    %21 = math.tanh %20 : vector<8x32xf32>
    %22 = vector.extract_strided_slice %7 {offsets = [24, 0], sizes = [8, 32], strides = [1, 1]} : vector<64x32xf32> to vector<8x32xf32>
    %cst_8 = arith.constant dense<0.000000e+00> : vector<8x32xf32>
    %23 = tpu.matmul %21, %8, %cst_8 {dimension_numbers = #tpu.dot_dimension_numbers<[1], [0], [0], [1], [0, 0, 1, 1], [], []>} : vector<8x32xf32>, vector<32x32xf32>, vector<8x32xf32> -> vector<8x32xf32>
    %24 = arith.addf %22, %23 : vector<8x32xf32>
    %25 = math.tanh %24 : vector<8x32xf32>
    %26 = vector.extract_strided_slice %7 {offsets = [32, 0], sizes = [8, 32], strides = [1, 1]} : vector<64x32xf32> to vector<8x32xf32>
    %cst_9 = arith.constant dense<0.000000e+00> : vector<8x32xf32>
    %27 = tpu.matmul %25, %8, %cst_9 {dimension_numbers = #tpu.dot_dimension_numbers<[1], [0], [0], [1], [0, 0, 1, 1], [], []>} : vector<8x32xf32>, vector<32x32xf32>, vector<8x32xf32> -> vector<8x32xf32>
    %28 = arith.addf %26, %27 : vector<8x32xf32>
    %29 = math.tanh %28 : vector<8x32xf32>
    %30 = vector.extract_strided_slice %7 {offsets = [40, 0], sizes = [8, 32], strides = [1, 1]} : vector<64x32xf32> to vector<8x32xf32>
    %cst_10 = arith.constant dense<0.000000e+00> : vector<8x32xf32>
    %31 = tpu.matmul %29, %8, %cst_10 {dimension_numbers = #tpu.dot_dimension_numbers<[1], [0], [0], [1], [0, 0, 1, 1], [], []>} : vector<8x32xf32>, vector<32x32xf32>, vector<8x32xf32> -> vector<8x32xf32>
    %32 = arith.addf %30, %31 : vector<8x32xf32>
    %33 = math.tanh %32 : vector<8x32xf32>
    %34 = vector.extract_strided_slice %7 {offsets = [48, 0], sizes = [8, 32], strides = [1, 1]} : vector<64x32xf32> to vector<8x32xf32>
    %cst_11 = arith.constant dense<0.000000e+00> : vector<8x32xf32>
    %35 = tpu.matmul %33, %8, %cst_11 {dimension_numbers = #tpu.dot_dimension_numbers<[1], [0], [0], [1], [0, 0, 1, 1], [], []>} : vector<8x32xf32>, vector<32x32xf32>, vector<8x32xf32> -> vector<8x32xf32>
    %36 = arith.addf %34, %35 : vector<8x32xf32>
    %37 = math.tanh %36 : vector<8x32xf32>
    %38 = vector.extract_strided_slice %7 {offsets = [56, 0], sizes = [8, 32], strides = [1, 1]} : vector<64x32xf32> to vector<8x32xf32>
    %cst_12 = arith.constant dense<0.000000e+00> : vector<8x32xf32>
    %39 = tpu.matmul %37, %8, %cst_12 {dimension_numbers = #tpu.dot_dimension_numbers<[1], [0], [0], [1], [0, 0, 1, 1], [], []>} : vector<8x32xf32>, vector<32x32xf32>, vector<8x32xf32> -> vector<8x32xf32>
    %40 = arith.addf %38, %39 : vector<8x32xf32>
    %41 = math.tanh %40 : vector<8x32xf32>
    %c64 = arith.constant 64 : index
    %c0_13 = arith.constant 0 : index
    %42 = vector.load %arg1[%c64, %c0_13] : memref<168x128xf32, #tpu.memory_space<vmem>>, vector<32x32xf32>
    %cst_14 = arith.constant dense<0.000000e+00> : vector<8x32xf32>
    %43 = tpu.matmul %41, %42, %cst_14 {dimension_numbers = #tpu.dot_dimension_numbers<[1], [0], [0], [1], [0, 0, 1, 1], [], []>} : vector<8x32xf32>, vector<32x32xf32>, vector<8x32xf32> -> vector<8x32xf32>
    %c160 = arith.constant 160 : index
    %c0_15 = arith.constant 0 : index
    %44 = vector.load %arg1[%c160, %c0_15] : memref<168x128xf32, #tpu.memory_space<vmem>>, vector<1x32xf32>
    %45 = vector.broadcast %44 : vector<1x32xf32> to vector<8x32xf32>
    %46 = arith.addf %43, %45 : vector<8x32xf32>
    %cst_16 = arith.constant 0.000000e+00 : f32
    %47 = vector.broadcast %cst_16 : f32 to vector<8x32xf32>
    %48 = arith.maximumf %46, %47 : vector<8x32xf32>
    %c161 = arith.constant 161 : index
    %c0_17 = arith.constant 0 : index
    %49 = vector.load %arg1[%c161, %c0_17] : memref<168x128xf32, #tpu.memory_space<vmem>>, vector<1x32xf32>
    %c162 = arith.constant 162 : index
    %c0_18 = arith.constant 0 : index
    %50 = vector.load %arg1[%c162, %c0_18] : memref<168x128xf32, #tpu.memory_space<vmem>>, vector<1x32xf32>
    %cst_19 = arith.constant dense<0.000000e+00> : vector<8xf32>
    %51 = vector.multi_reduction <add>, %48, %cst_19 [1] : vector<8x32xf32> to vector<8xf32>
    %52 = vector.shape_cast %51 : vector<8xf32> to vector<8x1xf32>
    %cst_20 = arith.constant 3.200000e+01 : f32
    %53 = vector.broadcast %cst_20 : f32 to vector<8x1xf32>
    %54 = arith.divf %52, %53 : vector<8x1xf32>
    %55 = arith.mulf %48, %48 : vector<8x32xf32>
    %cst_21 = arith.constant dense<0.000000e+00> : vector<8xf32>
    %56 = vector.multi_reduction <add>, %55, %cst_21 [1] : vector<8x32xf32> to vector<8xf32>
    %57 = vector.shape_cast %56 : vector<8xf32> to vector<8x1xf32>
    %cst_22 = arith.constant 3.200000e+01 : f32
    %58 = vector.broadcast %cst_22 : f32 to vector<8x1xf32>
    %59 = arith.divf %57, %58 : vector<8x1xf32>
    %60 = arith.mulf %54, %54 : vector<8x1xf32>
    %61 = arith.subf %59, %60 : vector<8x1xf32>
    %62 = vector.broadcast %54 : vector<8x1xf32> to vector<8x32xf32>
    %63 = arith.subf %48, %62 : vector<8x32xf32>
    %cst_23 = arith.constant 9.99999974E-6 : f32
    %64 = vector.broadcast %cst_23 : f32 to vector<8x1xf32>
    %65 = arith.addf %61, %64 : vector<8x1xf32>
    %66 = math.rsqrt %65 : vector<8x1xf32>
    %67 = vector.broadcast %66 : vector<8x1xf32> to vector<8x32xf32>
    %68 = arith.mulf %63, %67 : vector<8x32xf32>
    %69 = vector.broadcast %49 : vector<1x32xf32> to vector<8x32xf32>
    %70 = arith.mulf %68, %69 : vector<8x32xf32>
    %71 = vector.broadcast %50 : vector<1x32xf32> to vector<8x32xf32>
    %72 = arith.addf %70, %71 : vector<8x32xf32>
    %c96 = arith.constant 96 : index
    %c0_24 = arith.constant 0 : index
    %73 = vector.load %arg1[%c96, %c0_24] : memref<168x128xf32, #tpu.memory_space<vmem>>, vector<32x32xf32>
    %cst_25 = arith.constant dense<0.000000e+00> : vector<8x32xf32>
    %74 = tpu.matmul %72, %73, %cst_25 {dimension_numbers = #tpu.dot_dimension_numbers<[1], [0], [0], [1], [0, 0, 1, 1], [], []>} : vector<8x32xf32>, vector<32x32xf32>, vector<8x32xf32> -> vector<8x32xf32>
    %c163 = arith.constant 163 : index
    %c0_26 = arith.constant 0 : index
    %75 = vector.load %arg1[%c163, %c0_26] : memref<168x128xf32, #tpu.memory_space<vmem>>, vector<1x32xf32>
    %76 = vector.broadcast %75 : vector<1x32xf32> to vector<8x32xf32>
    %77 = arith.addf %74, %76 : vector<8x32xf32>
    %cst_27 = arith.constant 0.000000e+00 : f32
    %78 = vector.broadcast %cst_27 : f32 to vector<8x32xf32>
    %79 = arith.maximumf %77, %78 : vector<8x32xf32>
    %c164 = arith.constant 164 : index
    %c0_28 = arith.constant 0 : index
    %80 = vector.load %arg1[%c164, %c0_28] : memref<168x128xf32, #tpu.memory_space<vmem>>, vector<1x32xf32>
    %c165 = arith.constant 165 : index
    %c0_29 = arith.constant 0 : index
    %81 = vector.load %arg1[%c165, %c0_29] : memref<168x128xf32, #tpu.memory_space<vmem>>, vector<1x32xf32>
    %cst_30 = arith.constant dense<0.000000e+00> : vector<8xf32>
    %82 = vector.multi_reduction <add>, %79, %cst_30 [1] : vector<8x32xf32> to vector<8xf32>
    %83 = vector.shape_cast %82 : vector<8xf32> to vector<8x1xf32>
    %cst_31 = arith.constant 3.200000e+01 : f32
    %84 = vector.broadcast %cst_31 : f32 to vector<8x1xf32>
    %85 = arith.divf %83, %84 : vector<8x1xf32>
    %86 = arith.mulf %79, %79 : vector<8x32xf32>
    %cst_32 = arith.constant dense<0.000000e+00> : vector<8xf32>
    %87 = vector.multi_reduction <add>, %86, %cst_32 [1] : vector<8x32xf32> to vector<8xf32>
    %88 = vector.shape_cast %87 : vector<8xf32> to vector<8x1xf32>
    %cst_33 = arith.constant 3.200000e+01 : f32
    %89 = vector.broadcast %cst_33 : f32 to vector<8x1xf32>
    %90 = arith.divf %88, %89 : vector<8x1xf32>
    %91 = arith.mulf %85, %85 : vector<8x1xf32>
    %92 = arith.subf %90, %91 : vector<8x1xf32>
    %93 = vector.broadcast %85 : vector<8x1xf32> to vector<8x32xf32>
    %94 = arith.subf %79, %93 : vector<8x32xf32>
    %cst_34 = arith.constant 9.99999974E-6 : f32
    %95 = vector.broadcast %cst_34 : f32 to vector<8x1xf32>
    %96 = arith.addf %92, %95 : vector<8x1xf32>
    %97 = math.rsqrt %96 : vector<8x1xf32>
    %98 = vector.broadcast %97 : vector<8x1xf32> to vector<8x32xf32>
    %99 = arith.mulf %94, %98 : vector<8x32xf32>
    %100 = vector.broadcast %80 : vector<1x32xf32> to vector<8x32xf32>
    %101 = arith.mulf %99, %100 : vector<8x32xf32>
    %102 = vector.broadcast %81 : vector<1x32xf32> to vector<8x32xf32>
    %103 = arith.addf %101, %102 : vector<8x32xf32>
    %c128 = arith.constant 128 : index
    %c0_35 = arith.constant 0 : index
    %104 = vector.load %arg1[%c128, %c0_35] : memref<168x128xf32, #tpu.memory_space<vmem>>, vector<32x128xf32>
    %cst_36 = arith.constant dense<0.000000e+00> : vector<8x128xf32>
    %105 = tpu.matmul %103, %104, %cst_36 {dimension_numbers = #tpu.dot_dimension_numbers<[1], [0], [0], [1], [0, 0, 1, 1], [], []>} : vector<8x32xf32>, vector<32x128xf32>, vector<8x128xf32> -> vector<8x128xf32>
    %c166 = arith.constant 166 : index
    %c0_37 = arith.constant 0 : index
    %106 = vector.load %arg1[%c166, %c0_37] : memref<168x128xf32, #tpu.memory_space<vmem>>, vector<1x128xf32>
    %107 = vector.broadcast %106 : vector<1x128xf32> to vector<8x128xf32>
    %108 = arith.addf %105, %107 : vector<8x128xf32>
    %c0_38 = arith.constant 0 : index
    %c0_39 = arith.constant 0 : index
    %109 = vector.load %arg2[%c0_38, %c0_39] : memref<8x128xf32, #tpu.memory_space<vmem>>, vector<8x128xf32>
    tpu.vector_store %arg2[%c0_38, %c0_39], %108 {strides = array<i32>} : memref<8x128xf32, #tpu.memory_space<vmem>>, vector<8x128xf32>,
    return
  }
}

</mosaic_0001>

<llo_original>
// kernel: rnn_tower_forward.1
$region0: #{rnn_tower_forward.1}
  #allocation0 [shape = 'u32[]', space=smem, size = 0x4, offset = 0x4, fixed_abs, tag = 'smem constant byte address 0x4 - core index']
  #allocation1 [shape = 'u32[144,128]{1,0:T(1,128)}', space=vmem, size = 0x12000, scoped, tag = 'internal scratch']
  %s0 = inlined_call_operand.vmem [shape: s32[64,1], index: 0, kind: input, shape index: {}]
  %s1 = inlined_call_operand.vmem [shape: f32[168,128], index: 1, kind: input, shape index: {}]
  %s2 = inlined_call_operand.hbm [shape: f32[8,128], index: 2, kind: output, shape index: {}]
  %s3 = sld [smem:[#allocation0]]
  $region18: #{rnn_tower_forward.1} parent=0
    _
  %s5 = ssub.s32 1, %s3
  %s6 = scalar_select 0, %s5, %s3
  $region1: #{rnn_tower_forward.1} parent=0
    #allocation2 [shape = 'u8[4096]{0}', space=vmem, size = 0x1000, scoped, tag = 'output window, operand 0, single buffered']
    #allocation3 [shape = 's32[1]{0}', space=sflag, size = 0x4, scoped, tag = 'scoped memory for rnn_tower_forward.1']
    %7 = vsyncpa [#allocation3], 0
    // Predicated region
    $region2: #{rnn_tower_forward.1} parent=1 // pred_check
      _
    $region3: #{rnn_tower_forward.1} parent=1 // pred_check_branch
      %9 = sbr.rel (0) target = $region5
    $region4: #{rnn_tower_forward.1} parent=1 // pred_region
      _
    $region5: #{rnn_tower_forward.1} parent=1 // pred_fallthru
      _
    // Predicated region
    $region6: #{rnn_tower_forward.1} parent=1 // pred_check
      _
    $region7: #{rnn_tower_forward.1} parent=1 // pred_check_branch
      %11 = sbr.rel (0) target = $region9
    $region8: #{rnn_tower_forward.1} parent=1 // pred_region
      _
    $region9: #{rnn_tower_forward.1} parent=1 // pred_fallthru
      _
    %v12 = vlaneseq
    %v13 = vand.u32 %v12, 127
    %v14 = vld [vmem:[%s0] sm:$0xff]
    %v15 = vld [vmem:[%s0 + $0x8] sm:$0xff]
    %v16 = vld [vmem:[%s0 + $0x10] sm:$0xff]
    %v17 = vld [vmem:[%s0 + $0x18] sm:$0xff]
    %v18 = vld [vmem:[%s0 + $0x20] sm:$0xff]
    %v19 = vld [vmem:[%s0 + $0x28] sm:$0xff]
    %v20 = vld [vmem:[%s0 + $0x30] sm:$0xff]
    %v21 = vld [vmem:[%s0 + $0x38] sm:$0xff]
    %22 = vset.pattern.permute.xlu0 0
    %23 = vperm.xlu0 %22, %v14
    %v24 = vpop.permute.xlu0 %23
    %25 = vset.pattern.permute.xlu0 0
    %26 = vperm.xlu0 %25, %v15
    %v27 = vpop.permute.xlu0 %26
    %28 = vset.pattern.permute.xlu0 0
    %29 = vperm.xlu0 %28, %v16
    %v30 = vpop.permute.xlu0 %29
    %31 = vset.pattern.permute.xlu0 0
    %32 = vperm.xlu0 %31, %v17
    %v33 = vpop.permute.xlu0 %32
    %34 = vset.pattern.permute.xlu0 0
    %35 = vperm.xlu0 %34, %v18
    %v36 = vpop.permute.xlu0 %35
    %37 = vset.pattern.permute.xlu0 0
    %38 = vperm.xlu0 %37, %v19
    %v39 = vpop.permute.xlu0 %38
    %40 = vset.pattern.permute.xlu0 0
    %41 = vperm.xlu0 %40, %v20
    %v42 = vpop.permute.xlu0 %41
    %43 = vset.pattern.permute.xlu0 0
    %44 = vperm.xlu0 %43, %v21
    %v45 = vpop.permute.xlu0 %44
    %vm46 = vcmp.eq.s32.totalorder %v13, %v24
    %vm47 = vcmp.eq.s32.totalorder %v13, %v27
    %vm48 = vcmp.eq.s32.totalorder %v13, %v30
    %vm49 = vcmp.eq.s32.totalorder %v13, %v33
    %vm50 = vcmp.eq.s32.totalorder %v13, %v36
    %vm51 = vcmp.eq.s32.totalorder %v13, %v39
    %vm52 = vcmp.eq.s32.totalorder %v13, %v42
    %vm53 = vcmp.eq.s32.totalorder %v13, %v45
    %v54 = vsel %vm46, 1, 0
    %v55 = vsel %vm47, 1, 0
    %v56 = vsel %vm48, 1, 0
    %v57 = vsel %vm49, 1, 0
    %v58 = vsel %vm50, 1, 0
    %v59 = vsel %vm51, 1, 0
    %v60 = vsel %vm52, 1, 0
    %v61 = vsel %vm53, 1, 0
    %v62 = vcvt.s32.f32 %v54
    %v63 = vcvt.s32.f32 %v55
    %v64 = vcvt.s32.f32 %v56
    %v65 = vcvt.s32.f32 %v57
    %v66 = vcvt.s32.f32 %v58
    %v67 = vcvt.s32.f32 %v59
    %v68 = vcvt.s32.f32 %v60
    %v69 = vcvt.s32.f32 %v61
    %v70 = vld [vmem:[%s1] sm:$0xff]
    %v71 = vld [vmem:[%s1 + $0x8] sm:$0xff]
    %v72 = vld [vmem:[%s1 + $0x10] sm:$0xff]
    %v73 = vld [vmem:[%s1 + $0x18] sm:$0xff]
    %vm74 = vcmask 261120
    %v76 = vsel %vm74, %v62, 0
    %v79 = vsel %vm74, %v63, 0
    %v82 = vsel %vm74, %v64, 0
    %v85 = vsel %vm74, %v65, 0
    %v88 = vsel %vm74, %v66, 0
    %v91 = vsel %vm74, %v67, 0
    %v94 = vsel %vm74, %v68, 0
    %v97 = vsel %vm74, %v69, 0
    %99 = vmatprep.subr.mxu0 0.0
    %100 = vmatpush1.msra.mxu0 %v70
    %101 = vmatprep.subr.mxu0 0.0
    %102 = vmatpush1.msra.mxu0 %v71
    %103 = vmatprep.subr.mxu0 0.0
    %104 = vmatpush1.msra.mxu0 %v72
    %105 = vmatprep.subr.mxu0 0.0
    %106 = vmatpush1.msra.mxu0 %v73
    %107 = vmatprep.subr.mxu0 0.0
    %108 = vmatpush1.msra.mxu0 0.0
    %109 = vmatprep.subr.mxu0 0.0
    %110 = vmatpush1.msra.mxu0 0.0
    %111 = vmatprep.subr.mxu0 0.0
    %112 = vmatpush1.msra.mxu0 0.0
    %113 = vmatprep.subr.mxu0 0.0
    %114 = vmatpush1.msra.mxu0 0.0
    %115 = vmatprep.subr.mxu0 0.0
    %116 = vmatpush1.msra.mxu0 0.0
    %117 = vmatprep.subr.mxu0 0.0
    %118 = vmatpush1.msra.mxu0 0.0
    %119 = vmatprep.subr.mxu0 0.0
    %120 = vmatpush1.msra.mxu0 0.0
    %121 = vmatprep.subr.mxu0 0.0
    %122 = vmatpush1.msra.mxu0 0.0
    %123 = vmatprep.subr.mxu0 0.0
    %124 = vmatpush1.msra.mxu0 0.0
    %125 = vmatprep.subr.mxu0 0.0
    %126 = vmatpush1.msra.mxu0 0.0
    %127 = vmatprep.subr.mxu0 0.0
    %128 = vmatpush1.msra.mxu0 0.0
    %129 = vmatprep.subr.mxu0 0.0
    %130 = vmatpush1.msra.mxu0 0.0
    %131 = vmatprep.subr.mxu0 0.0
    %132 = vmatpush1.msra.mxu0 0.0
    %133 = vmatprep.subr.mxu0 0.0
    %134 = vmatpush1.msra.mxu0 0.0
    %135 = vmatprep.subr.mxu0 0.0
    %136 = vmatpush1.msra.mxu0 0.0
    %137 = vmatprep.subr.mxu0 0.0
    %138 = vmatpush1.msra.mxu0 0.0
    %139 = vmatprep.subr.mxu0 0.0
    %140 = vmatpush1.msra.mxu0 0.0
    %141 = vmatprep.subr.mxu0 0.0
    %142 = vmatpush1.msra.mxu0 0.0
    %143 = vmatprep.subr.mxu0 0.0
    %144 = vmatpush1.msra.mxu0 0.0
    %145 = vmatprep.subr.mxu0 0.0
    %146 = vmatpush1.msra.mxu0 0.0
    %147 = vmatprep.subr.mxu0 0.0
    %148 = vmatpush1.msra.mxu0 0.0
    %149 = vmatprep.subr.mxu0 0.0
    %150 = vmatpush1.msra.mxu0 0.0
    %151 = vmatprep.subr.mxu0 0.0
    %152 = vmatpush1.msra.mxu0 0.0
    %153 = vmatprep.subr.mxu0 0.0
    %154 = vmatpush1.msra.mxu0 0.0
    %155 = vmatprep.subr.mxu0 0.0
    %156 = vmatpush1.msra.mxu0 0.0
    %157 = vmatprep.subr.mxu0 0.0
    %158 = vmatpush1.msra.mxu0 0.0
    %159 = vmatprep.subr.mxu0 0.0
    %160 = vmatpush1.msra.mxu0 0.0
    %161 = vmatprep.subr.mxu0 0.0
    %162 = vmatpush1.msra.mxu0 0.0
    %163 = vmatprep.mubr.f32.mxu0 0.0
    %164 = vmatmul.mubr.f32.gmra.mrb[0].mxu0 %v76
    %v165 = vpop.f32.mrb[0].mxu0
    %v166 = vadd.f32 0.0, %v165
    %v167 = vpop.f32.mrb[0].mxu0
    %168 = vmatprep.mubr.f32.mxu0 0.0
    %169 = vmatmul.mubr.f32.gmra.mrb[0].mxu0 %v79
    %v170 = vpop.f32.mrb[0].mxu0
    %v171 = vadd.f32 0.0, %v170
    %v172 = vpop.f32.mrb[0].mxu0
    %173 = vmatprep.mubr.f32.mxu0 0.0
    %174 = vmatmul.mubr.f32.gmra.mrb[0].mxu0 %v82
    %v175 = vpop.f32.mrb[0].mxu0
    %v176 = vadd.f32 0.0, %v175
    %v177 = vpop.f32.mrb[0].mxu0
    %178 = vmatprep.mubr.f32.mxu0 0.0
    %179 = vmatmul.mubr.f32.gmra.mrb[0].mxu0 %v85
    %v180 = vpop.f32.mrb[0].mxu0
    %v181 = vadd.f32 0.0, %v180
    %v182 = vpop.f32.mrb[0].mxu0
    %183 = vmatprep.mubr.f32.mxu0 0.0
    %184 = vmatmul.mubr.f32.gmra.mrb[0].mxu0 %v88
    %v185 = vpop.f32.mrb[0].mxu0
    %v186 = vadd.f32 0.0, %v185
    %v187 = vpop.f32.mrb[0].mxu0
    %188 = vmatprep.mubr.f32.mxu0 0.0
    %189 = vmatmul.mubr.f32.gmra.mrb[0].mxu0 %v91
    %v190 = vpop.f32.mrb[0].mxu0
    %v191 = vadd.f32 0.0, %v190
    %v192 = vpop.f32.mrb[0].mxu0
    %193 = vmatprep.mubr.f32.mxu0 0.0
    %194 = vmatmul.mubr.f32.gmra.mrb[0].mxu0 %v94
    %v195 = vpop.f32.mrb[0].mxu0
    %v196 = vadd.f32 0.0, %v195
    %v197 = vpop.f32.mrb[0].mxu0
    %198 = vmatprep.mubr.f32.mxu0 0.0
    %199 = vmatmul.mubr.f32.gmra.mrb[0].mxu0 %v97
    %v200 = vpop.f32.mrb[0].mxu0
    %v201 = vadd.f32 0.0, %v200
    %v202 = vpop.f32.mrb[0].mxu0
    %203 = vdwg.mxu0
    %v204 = vld [vmem:[%s1 + $0x20] sm:$0xff]
    %v205 = vld [vmem:[%s1 + $0x28] sm:$0xff]
    %v206 = vld [vmem:[%s1 + $0x30] sm:$0xff]
    %v207 = vld [vmem:[%s1 + $0x38] sm:$0xff]
    %v209 = vsel %vm74, 0.0, 0
    %211 = vmatprep.subr.mxu0 0.0
    %212 = vmatpush1.msra.mxu0 %v204
    %213 = vmatprep.subr.mxu0 0.0
    %214 = vmatpush1.msra.mxu0 %v205
    %215 = vmatprep.subr.mxu0 0.0
    %216 = vmatpush1.msra.mxu0 %v206
    %217 = vmatprep.subr.mxu0 0.0
    %218 = vmatpush1.msra.mxu0 %v207
    %219 = vmatprep.subr.mxu0 0.0
    %220 = vmatpush1.msra.mxu0 0.0
    %221 = vmatprep.subr.mxu0 0.0
    %222 = vmatpush1.msra.mxu0 0.0
    %223 = vmatprep.subr.mxu0 0.0
    %224 = vmatpush1.msra.mxu0 0.0
    %225 = vmatprep.subr.mxu0 0.0
    %226 = vmatpush1.msra.mxu0 0.0
    %227 = vmatprep.subr.mxu0 0.0
    %228 = vmatpush1.msra.mxu0 0.0
    %229 = vmatprep.subr.mxu0 0.0
    %230 = vmatpush1.msra.mxu0 0.0
    %231 = vmatprep.subr.mxu0 0.0
    %232 = vmatpush1.msra.mxu0 0.0
    %233 = vmatprep.subr.mxu0 0.0
    %234 = vmatpush1.msra.mxu0 0.0
    %235 = vmatprep.subr.mxu0 0.0
    %236 = vmatpush1.msra.mxu0 0.0
    %237 = vmatprep.subr.mxu0 0.0
    %238 = vmatpush1.msra.mxu0 0.0
    %239 = vmatprep.subr.mxu0 0.0
    %240 = vmatpush1.msra.mxu0 0.0
    %241 = vmatprep.subr.mxu0 0.0
    %242 = vmatpush1.msra.mxu0 0.0
    %243 = vmatprep.subr.mxu0 0.0
    %244 = vmatpush1.msra.mxu0 0.0
    %245 = vmatprep.subr.mxu0 0.0
    %246 = vmatpush1.msra.mxu0 0.0
    %247 = vmatprep.subr.mxu0 0.0
    %248 = vmatpush1.msra.mxu0 0.0
    %249 = vmatprep.subr.mxu0 0.0
    %250 = vmatpush1.msra.mxu0 0.0
    %251 = vmatprep.subr.mxu0 0.0
    %252 = vmatpush1.msra.mxu0 0.0
    %253 = vmatprep.subr.mxu0 0.0
    %254 = vmatpush1.msra.mxu0 0.0
    %255 = vmatprep.subr.mxu0 0.0
    %256 = vmatpush1.msra.mxu0 0.0
    %257 = vmatprep.subr.mxu0 0.0
    %258 = vmatpush1.msra.mxu0 0.0
    %259 = vmatprep.subr.mxu0 0.0
    %260 = vmatpush1.msra.mxu0 0.0
    %261 = vmatprep.subr.mxu0 0.0
    %262 = vmatpush1.msra.mxu0 0.0
    %263 = vmatprep.subr.mxu0 0.0
    %264 = vmatpush1.msra.mxu0 0.0
    %265 = vmatprep.subr.mxu0 0.0
    %266 = vmatpush1.msra.mxu0 0.0
    %267 = vmatprep.subr.mxu0 0.0
    %268 = vmatpush1.msra.mxu0 0.0
    %269 = vmatprep.subr.mxu0 0.0
    %270 = vmatpush1.msra.mxu0 0.0
    %271 = vmatprep.subr.mxu0 0.0
    %272 = vmatpush1.msra.mxu0 0.0
    %273 = vmatprep.subr.mxu0 0.0
    %274 = vmatpush1.msra.mxu0 0.0
    %275 = vmatprep.mubr.f32.mxu0 0.0
    %276 = vmatmul.mubr.f32.gmra.mrb[0].mxu0 %v209
    %v277 = vpop.f32.mrb[0].mxu0
    %v278 = vadd.f32 0.0, %v277
    %v279 = vpop.f32.mrb[0].mxu0
    %280 = vdwg.mxu0
    %v281 = vadd.f32 %v166, %v278
    %v282 = vtanh.pop %v281
    %v284 = vsel %vm74, %v282, 0
    %286 = vmatprep.subr.mxu0 0.0
    %287 = vmatpush1.msra.mxu0 %v204
    %288 = vmatprep.subr.mxu0 0.0
    %289 = vmatpush1.msra.mxu0 %v205
    %290 = vmatprep.subr.mxu0 0.0
    %291 = vmatpush1.msra.mxu0 %v206
    %292 = vmatprep.subr.mxu0 0.0
    %293 = vmatpush1.msra.mxu0 %v207
    %294 = vmatprep.subr.mxu0 0.0
    %295 = vmatpush1.msra.mxu0 0.0
    %296 = vmatprep.subr.mxu0 0.0
    %297 = vmatpush1.msra.mxu0 0.0
    %298 = vmatprep.subr.mxu0 0.0
    %299 = vmatpush1.msra.mxu0 0.0
    %300 = vmatprep.subr.mxu0 0.0
    %301 = vmatpush1.msra.mxu0 0.0
    %302 = vmatprep.subr.mxu0 0.0
    %303 = vmatpush1.msra.mxu0 0.0
    %304 = vmatprep.subr.mxu0 0.0
    %305 = vmatpush1.msra.mxu0 0.0
    %306 = vmatprep.subr.mxu0 0.0
    %307 = vmatpush1.msra.mxu0 0.0
    %308 = vmatprep.subr.mxu0 0.0
    %309 = vmatpush1.msra.mxu0 0.0
    %310 = vmatprep.subr.mxu0 0.0
    %311 = vmatpush1.msra.mxu0 0.0
    %312 = vmatprep.subr.mxu0 0.0
    %313 = vmatpush1.msra.mxu0 0.0
    %314 = vmatprep.subr.mxu0 0.0
    %315 = vmatpush1.msra.mxu0 0.0
    %316 = vmatprep.subr.mxu0 0.0
    %317 = vmatpush1.msra.mxu0 0.0
    %318 = vmatprep.subr.mxu0 0.0
    %319 = vmatpush1.msra.mxu0 0.0
    %320 = vmatprep.subr.mxu0 0.0
    %321 = vmatpush1.msra.mxu0 0.0
    %322 = vmatprep.subr.mxu0 0.0
    %323 = vmatpush1.msra.mxu0 0.0
    %324 = vmatprep.subr.mxu0 0.0
    %325 = vmatpush1.msra.mxu0 0.0
    %326 = vmatprep.subr.mxu0 0.0
    %327 = vmatpush1.msra.mxu0 0.0
    %328 = vmatprep.subr.mxu0 0.0
    %329 = vmatpush1.msra.mxu0 0.0
    %330 = vmatprep.subr.mxu0 0.0
    %331 = vmatpush1.msra.mxu0 0.0
    %332 = vmatprep.subr.mxu0 0.0
    %333 = vmatpush1.msra.mxu0 0.0
    %334 = vmatprep.subr.mxu0 0.0
    %335 = vmatpush1.msra.mxu0 0.0
    %336 = vmatprep.subr.mxu0 0.0
    %337 = vmatpush1.msra.mxu0 0.0
    %338 = vmatprep.subr.mxu0 0.0
    %339 = vmatpush1.msra.mxu0 0.0
    %340 = vmatprep.subr.mxu0 0.0
    %341 = vmatpush1.msra.mxu0 0.0
    %342 = vmatprep.subr.mxu0 0.0
    %343 = vmatpush1.msra.mxu0 0.0
    %344 = vmatprep.subr.mxu0 0.0
    %345 = vmatpush1.msra.mxu0 0.0
    %346 = vmatprep.subr.mxu0 0.0
    %347 = vmatpush1.msra.mxu0 0.0
    %348 = vmatprep.subr.mxu0 0.0
    %349 = vmatpush1.msra.mxu0 0.0
    %350 = vmatprep.mubr.f32.mxu0 0.0
    %351 = vmatmul.mubr.f32.gmra.mrb[0].mxu0 %v284
    %v352 = vpop.f32.mrb[0].mxu0
    %v353 = vadd.f32 0.0, %v352
    %v354 = vpop.f32.mrb[0].mxu0
    %355 = vdwg.mxu0
    %v356 = vadd.f32 %v171, %v353
    %v357 = vtanh.pop %v356
    %v359 = vsel %vm74, %v357, 0
    %361 = vmatprep.subr.mxu0 0.0
    %362 = vmatpush1.msra.mxu0 %v204
    %363 = vmatprep.subr.mxu0 0.0
    %364 = vmatpush1.msra.mxu0 %v205
    %365 = vmatprep.subr.mxu0 0.0
    %366 = vmatpush1.msra.mxu0 %v206
    %367 = vmatprep.subr.mxu0 0.0
    %368 = vmatpush1.msra.mxu0 %v207
    %369 = vmatprep.subr.mxu0 0.0
    %370 = vmatpush1.msra.mxu0 0.0
    %371 = vmatprep.subr.mxu0 0.0
    %372 = vmatpush1.msra.mxu0 0.0
    %373 = vmatprep.subr.mxu0 0.0
    %374 = vmatpush1.msra.mxu0 0.0
    %375 = vmatprep.subr.mxu0 0.0
    %376 = vmatpush1.msra.mxu0 0.0
    %377 = vmatprep.subr.mxu0 0.0
    %378 = vmatpush1.msra.mxu0 0.0
    %379 = vmatprep.subr.mxu0 0.0
    %380 = vmatpush1.msra.mxu0 0.0
    %381 = vmatprep.subr.mxu0 0.0
    %382 = vmatpush1.msra.mxu0 0.0
    %383 = vmatprep.subr.mxu0 0.0
    %384 = vmatpush1.msra.mxu0 0.0
    %385 = vmatprep.subr.mxu0 0.0
    %386 = vmatpush1.msra.mxu0 0.0
    %387 = vmatprep.subr.mxu0 0.0
    %388 = vmatpush1.msra.mxu0 0.0
    %389 = vmatprep.subr.mxu0 0.0
    %390 = vmatpush1.msra.mxu0 0.0
    %391 = vmatprep.subr.mxu0 0.0
    %392 = vmatpush1.msra.mxu0 0.0
    %393 = vmatprep.subr.mxu0 0.0
    %394 = vmatpush1.msra.mxu0 0.0
    %395 = vmatprep.subr.mxu0 0.0
    %396 = vmatpush1.msra.mxu0 0.0
    %397 = vmatprep.subr.mxu0 0.0
    %398 = vmatpush1.msra.mxu0 0.0
    %399 = vmatprep.subr.mxu0 0.0
    %400 = vmatpush1.msra.mxu0 0.0
    %401 = vmatprep.subr.mxu0 0.0
    %402 = vmatpush1.msra.mxu0 0.0
    %403 = vmatprep.subr.mxu0 0.0
    %404 = vmatpush1.msra.mxu0 0.0
    %405 = vmatprep.subr.mxu0 0.0
    %406 = vmatpush1.msra.mxu0 0.0
    %407 = vmatprep.subr.mxu0 0.0
    %408 = vmatpush1.msra.mxu0 0.0
    %409 = vmatprep.subr.mxu0 0.0
    %410 = vmatpush1.msra.mxu0 0.0
    %411 = vmatprep.subr.mxu0 0.0
    %412 = vmatpush1.msra.mxu0 0.0
    %413 = vmatprep.subr.mxu0 0.0
    %414 = vmatpush1.msra.mxu0 0.0
    %415 = vmatprep.subr.mxu0 0.0
    %416 = vmatpush1.msra.mxu0 0.0
    %417 = vmatprep.subr.mxu0 0.0
    %418 = vmatpush1.msra.mxu0 0.0
    %419 = vmatprep.subr.mxu0 0.0
    %420 = vmatpush1.msra.mxu0 0.0
    %421 = vmatprep.subr.mxu0 0.0
    %422 = vmatpush1.msra.mxu0 0.0
    %423 = vmatprep.subr.mxu0 0.0
    %424 = vmatpush1.msra.mxu0 0.0
    %425 = vmatprep.mubr.f32.mxu0 0.0
    %426 = vmatmul.mubr.f32.gmra.mrb[0].mxu0 %v359
    %v427 = vpop.f32.mrb[0].mxu0
    %v428 = vadd.f32 0.0, %v427
    %v429 = vpop.f32.mrb[0].mxu0
    %430 = vdwg.mxu0
    %v431 = vadd.f32 %v176, %v428
    %v432 = vtanh.pop %v431
    %v434 = vsel %vm74, %v432, 0
    %436 = vmatprep.subr.mxu0 0.0
    %437 = vmatpush1.msra.mxu0 %v204
    %438 = vmatprep.subr.mxu0 0.0
    %439 = vmatpush1.msra.mxu0 %v205
    %440 = vmatprep.subr.mxu0 0.0
    %441 = vmatpush1.msra.mxu0 %v206
    %442 = vmatprep.subr.mxu0 0.0
    %443 = vmatpush1.msra.mxu0 %v207
    %444 = vmatprep.subr.mxu0 0.0
    %445 = vmatpush1.msra.mxu0 0.0
    %446 = vmatprep.subr.mxu0 0.0
    %447 = vmatpush1.msra.mxu0 0.0
    %448 = vmatprep.subr.mxu0 0.0
    %449 = vmatpush1.msra.mxu0 0.0
    %450 = vmatprep.subr.mxu0 0.0
    %451 = vmatpush1.msra.mxu0 0.0
    %452 = vmatprep.subr.mxu0 0.0
    %453 = vmatpush1.msra.mxu0 0.0
    %454 = vmatprep.subr.mxu0 0.0
    %455 = vmatpush1.msra.mxu0 0.0
    %456 = vmatprep.subr.mxu0 0.0
    %457 = vmatpush1.msra.mxu0 0.0
    %458 = vmatprep.subr.mxu0 0.0
    %459 = vmatpush1.msra.mxu0 0.0
    %460 = vmatprep.subr.mxu0 0.0
    %461 = vmatpush1.msra.mxu0 0.0
    %462 = vmatprep.subr.mxu0 0.0
    %463 = vmatpush1.msra.mxu0 0.0
    %464 = vmatprep.subr.mxu0 0.0
    %465 = vmatpush1.msra.mxu0 0.0
    %466 = vmatprep.subr.mxu0 0.0
    %467 = vmatpush1.msra.mxu0 0.0
    %468 = vmatprep.subr.mxu0 0.0
    %469 = vmatpush1.msra.mxu0 0.0
    %470 = vmatprep.subr.mxu0 0.0
    %471 = vmatpush1.msra.mxu0 0.0
    %472 = vmatprep.subr.mxu0 0.0
    %473 = vmatpush1.msra.mxu0 0.0
    %474 = vmatprep.subr.mxu0 0.0
    %475 = vmatpush1.msra.mxu0 0.0
    %476 = vmatprep.subr.mxu0 0.0
    %477 = vmatpush1.msra.mxu0 0.0
    %478 = vmatprep.subr.mxu0 0.0
    %479 = vmatpush1.msra.mxu0 0.0
    %480 = vmatprep.subr.mxu0 0.0
    %481 = vmatpush1.msra.mxu0 0.0
    %482 = vmatprep.subr.mxu0 0.0
    %483 = vmatpush1.msra.mxu0 0.0
    %484 = vmatprep.subr.mxu0 0.0
    %485 = vmatpush1.msra.mxu0 0.0
    %486 = vmatprep.subr.mxu0 0.0
    %487 = vmatpush1.msra.mxu0 0.0
    %488 = vmatprep.subr.mxu0 0.0
    %489 = vmatpush1.msra.mxu0 0.0
    %490 = vmatprep.subr.mxu0 0.0
    %491 = vmatpush1.msra.mxu0 0.0
    %492 = vmatprep.subr.mxu0 0.0
    %493 = vmatpush1.msra.mxu0 0.0
    %494 = vmatprep.subr.mxu0 0.0
    %495 = vmatpush1.msra.mxu0 0.0
    %496 = vmatprep.subr.mxu0 0.0
    %497 = vmatpush1.msra.mxu0 0.0
    %498 = vmatprep.subr.mxu0 0.0
    %499 = vmatpush1.msra.mxu0 0.0
    %500 = vmatprep.mubr.f32.mxu0 0.0
    %501 = vmatmul.mubr.f32.gmra.mrb[0].mxu0 %v434
    %v502 = vpop.f32.mrb[0].mxu0
    %v503 = vadd.f32 0.0, %v502
    %v504 = vpop.f32.mrb[0].mxu0
    %505 = vdwg.mxu0
    %v506 = vadd.f32 %v181, %v503
    %v507 = vtanh.pop %v506
    %v509 = vsel %vm74, %v507, 0
    %511 = vmatprep.subr.mxu0 0.0
    %512 = vmatpush1.msra.mxu0 %v204
    %513 = vmatprep.subr.mxu0 0.0
    %514 = vmatpush1.msra.mxu0 %v205
    %515 = vmatprep.subr.mxu0 0.0
    %516 = vmatpush1.msra.mxu0 %v206
    %517 = vmatprep.subr.mxu0 0.0
    %518 = vmatpush1.msra.mxu0 %v207
    %519 = vmatprep.subr.mxu0 0.0
    %520 = vmatpush1.msra.mxu0 0.0
    %521 = vmatprep.subr.mxu0 0.0
    %522 = vmatpush1.msra.mxu0 0.0
    %523 = vmatprep.subr.mxu0 0.0
    %524 = vmatpush1.msra.mxu0 0.0
    %525 = vmatprep.subr.mxu0 0.0
    %526 = vmatpush1.msra.mxu0 0.0
    %527 = vmatprep.subr.mxu0 0.0
    %528 = vmatpush1.msra.mxu0 0.0
    %529 = vmatprep.subr.mxu0 0.0
    %530 = vmatpush1.msra.mxu0 0.0
    %531 = vmatprep.subr.mxu0 0.0
    %532 = vmatpush1.msra.mxu0 0.0
    %533 = vmatprep.subr.mxu0 0.0
    %534 = vmatpush1.msra.mxu0 0.0
    %535 = vmatprep.subr.mxu0 0.0
    %536 = vmatpush1.msra.mxu0 0.0
    %537 = vmatprep.subr.mxu0 0.0
    %538 = vmatpush1.msra.mxu0 0.0
    %539 = vmatprep.subr.mxu0 0.0
    %540 = vmatpush1.msra.mxu0 0.0
    %541 = vmatprep.subr.mxu0 0.0
    %542 = vmatpush1.msra.mxu0 0.0
    %543 = vmatprep.subr.mxu0 0.0
    %544 = vmatpush1.msra.mxu0 0.0
    %545 = vmatprep.subr.mxu0 0.0
    %546 = vmatpush1.msra.mxu0 0.0
    %547 = vmatprep.subr.mxu0 0.0
    %548 = vmatpush1.msra.mxu0 0.0
    %549 = vmatprep.subr.mxu0 0.0
    %550 = vmatpush1.msra.mxu0 0.0
    %551 = vmatprep.subr.mxu0 0.0
    %552 = vmatpush1.msra.mxu0 0.0
    %553 = vmatprep.subr.mxu0 0.0
    %554 = vmatpush1.msra.mxu0 0.0
    %555 = vmatprep.subr.mxu0 0.0
    %556 = vmatpush1.msra.mxu0 0.0
    %557 = vmatprep.subr.mxu0 0.0
    %558 = vmatpush1.msra.mxu0 0.0
    %559 = vmatprep.subr.mxu0 0.0
    %560 = vmatpush1.msra.mxu0 0.0
    %561 = vmatprep.subr.mxu0 0.0
    %562 = vmatpush1.msra.mxu0 0.0
    %563 = vmatprep.subr.mxu0 0.0
    %564 = vmatpush1.msra.mxu0 0.0
    %565 = vmatprep.subr.mxu0 0.0
    %566 = vmatpush1.msra.mxu0 0.0
    %567 = vmatprep.subr.mxu0 0.0
    %568 = vmatpush1.msra.mxu0 0.0
    %569 = vmatprep.subr.mxu0 0.0
    %570 = vmatpush1.msra.mxu0 0.0
    %571 = vmatprep.subr.mxu0 0.0
    %572 = vmatpush1.msra.mxu0 0.0
    %573 = vmatprep.subr.mxu0 0.0
    %574 = vmatpush1.msra.mxu0 0.0
    %575 = vmatprep.mubr.f32.mxu0 0.0
    %576 = vmatmul.mubr.f32.gmra.mrb[0].mxu0 %v509
    %v577 = vpop.f32.mrb[0].mxu0
    %v578 = vadd.f32 0.0, %v577
    %v579 = vpop.f32.mrb[0].mxu0
    %580 = vdwg.mxu0
    %v581 = vadd.f32 %v186, %v578
    %v582 = vtanh.pop %v581
    %v584 = vsel %vm74, %v582, 0
    %586 = vmatprep.subr.mxu0 0.0
    %587 = vmatpush1.msra.mxu0 %v204
    %588 = vmatprep.subr.mxu0 0.0
    %589 = vmatpush1.msra.mxu0 %v205
    %590 = vmatprep.subr.mxu0 0.0
    %591 = vmatpush1.msra.mxu0 %v206
    %592 = vmatprep.subr.mxu0 0.0
    %593 = vmatpush1.msra.mxu0 %v207
    %594 = vmatprep.subr.mxu0 0.0
    %595 = vmatpush1.msra.mxu0 0.0
    %596 = vmatprep.subr.mxu0 0.0
    %597 = vmatpush1.msra.mxu0 0.0
    %598 = vmatprep.subr.mxu0 0.0
    %599 = vmatpush1.msra.mxu0 0.0
    %600 = vmatprep.subr.mxu0 0.0
    %601 = vmatpush1.msra.mxu0 0.0
    %602 = vmatprep.subr.mxu0 0.0
    %603 = vmatpush1.msra.mxu0 0.0
    %604 = vmatprep.subr.mxu0 0.0
    %605 = vmatpush1.msra.mxu0 0.0
    %606 = vmatprep.subr.mxu0 0.0
    %607 = vmatpush1.msra.mxu0 0.0
    %608 = vmatprep.subr.mxu0 0.0
    %609 = vmatpush1.msra.mxu0 0.0
    %610 = vmatprep.subr.mxu0 0.0
    %611 = vmatpush1.msra.mxu0 0.0
    %612 = vmatprep.subr.mxu0 0.0
    %613 = vmatpush1.msra.mxu0 0.0
    %614 = vmatprep.subr.mxu0 0.0
    %615 = vmatpush1.msra.mxu0 0.0
    %616 = vmatprep.subr.mxu0 0.0
    %617 = vmatpush1.msra.mxu0 0.0
    %618 = vmatprep.subr.mxu0 0.0
    %619 = vmatpush1.msra.mxu0 0.0
    %620 = vmatprep.subr.mxu0 0.0
    %621 = vmatpush1.msra.mxu0 0.0
    %622 = vmatprep.subr.mxu0 0.0
    %623 = vmatpush1.msra.mxu0 0.0
    %624 = vmatprep.subr.mxu0 0.0
    %625 = vmatpush1.msra.mxu0 0.0
    %626 = vmatprep.subr.mxu0 0.0
    %627 = vmatpush1.msra.mxu0 0.0
    %628 = vmatprep.subr.mxu0 0.0
    %629 = vmatpush1.msra.mxu0 0.0
    %630 = vmatprep.subr.mxu0 0.0
    %631 = vmatpush1.msra.mxu0 0.0
    %632 = vmatprep.subr.mxu0 0.0
    %633 = vmatpush1.msra.mxu0 0.0
    %634 = vmatprep.subr.mxu0 0.0
    %635 = vmatpush1.msra.mxu0 0.0
    %636 = vmatprep.subr.mxu0 0.0
    %637 = vmatpush1.msra.mxu0 0.0
    %638 = vmatprep.subr.mxu0 0.0
    %639 = vmatpush1.msra.mxu0 0.0
    %640 = vmatprep.subr.mxu0 0.0
    %641 = vmatpush1.msra.mxu0 0.0
    %642 = vmatprep.subr.mxu0 0.0
    %643 = vmatpush1.msra.mxu0 0.0
    %644 = vmatprep.subr.mxu0 0.0
    %645 = vmatpush1.msra.mxu0 0.0
    %646 = vmatprep.subr.mxu0 0.0
    %647 = vmatpush1.msra.mxu0 0.0
    %648 = vmatprep.subr.mxu0 0.0
    %649 = vmatpush1.msra.mxu0 0.0
    %650 = vmatprep.mubr.f32.mxu0 0.0
    %651 = vmatmul.mubr.f32.gmra.mrb[0].mxu0 %v584
    %v652 = vpop.f32.mrb[0].mxu0
    %v653 = vadd.f32 0.0, %v652
    %v654 = vpop.f32.mrb[0].mxu0
    %655 = vdwg.mxu0
    %v656 = vadd.f32 %v191, %v653
    %v657 = vtanh.pop %v656
    %v659 = vsel %vm74, %v657, 0
    %661 = vmatprep.subr.mxu0 0.0
    %662 = vmatpush1.msra.mxu0 %v204
    %663 = vmatprep.subr.mxu0 0.0
    %664 = vmatpush1.msra.mxu0 %v205
    %665 = vmatprep.subr.mxu0 0.0
    %666 = vmatpush1.msra.mxu0 %v206
    %667 = vmatprep.subr.mxu0 0.0
    %668 = vmatpush1.msra.mxu0 %v207
    %669 = vmatprep.subr.mxu0 0.0
    %670 = vmatpush1.msra.mxu0 0.0
    %671 = vmatprep.subr.mxu0 0.0
    %672 = vmatpush1.msra.mxu0 0.0
    %673 = vmatprep.subr.mxu0 0.0
    %674 = vmatpush1.msra.mxu0 0.0
    %675 = vmatprep.subr.mxu0 0.0
    %676 = vmatpush1.msra.mxu0 0.0
    %677 = vmatprep.subr.mxu0 0.0
    %678 = vmatpush1.msra.mxu0 0.0
    %679 = vmatprep.subr.mxu0 0.0
    %680 = vmatpush1.msra.mxu0 0.0
    %681 = vmatprep.subr.mxu0 0.0
    %682 = vmatpush1.msra.mxu0 0.0
    %683 = vmatprep.subr.mxu0 0.0
    %684 = vmatpush1.msra.mxu0 0.0
    %685 = vmatprep.subr.mxu0 0.0
    %686 = vmatpush1.msra.mxu0 0.0
    %687 = vmatprep.subr.mxu0 0.0
    %688 = vmatpush1.msra.mxu0 0.0
    %689 = vmatprep.subr.mxu0 0.0
    %690 = vmatpush1.msra.mxu0 0.0
    %691 = vmatprep.subr.mxu0 0.0
    %692 = vmatpush1.msra.mxu0 0.0
    %693 = vmatprep.subr.mxu0 0.0
    %694 = vmatpush1.msra.mxu0 0.0
    %695 = vmatprep.subr.mxu0 0.0
    %696 = vmatpush1.msra.mxu0 0.0
    %697 = vmatprep.subr.mxu0 0.0
    %698 = vmatpush1.msra.mxu0 0.0
    %699 = vmatprep.subr.mxu0 0.0
    %700 = vmatpush1.msra.mxu0 0.0
    %701 = vmatprep.subr.mxu0 0.0
    %702 = vmatpush1.msra.mxu0 0.0
    %703 = vmatprep.subr.mxu0 0.0
    %704 = vmatpush1.msra.mxu0 0.0
    %705 = vmatprep.subr.mxu0 0.0
    %706 = vmatpush1.msra.mxu0 0.0
    %707 = vmatprep.subr.mxu0 0.0
    %708 = vmatpush1.msra.mxu0 0.0
    %709 = vmatprep.subr.mxu0 0.0
    %710 = vmatpush1.msra.mxu0 0.0
    %711 = vmatprep.subr.mxu0 0.0
    %712 = vmatpush1.msra.mxu0 0.0
    %713 = vmatprep.subr.mxu0 0.0
    %714 = vmatpush1.msra.mxu0 0.0
    %715 = vmatprep.subr.mxu0 0.0
    %716 = vmatpush1.msra.mxu0 0.0
    %717 = vmatprep.subr.mxu0 0.0
    %718 = vmatpush1.msra.mxu0 0.0
    %719 = vmatprep.subr.mxu0 0.0
    %720 = vmatpush1.msra.mxu0 0.0
    %721 = vmatprep.subr.mxu0 0.0
    %722 = vmatpush1.msra.mxu0 0.0
    %723 = vmatprep.subr.mxu0 0.0
    %724 = vmatpush1.msra.mxu0 0.0
    %725 = vmatprep.mubr.f32.mxu0 0.0
    %726 = vmatmul.mubr.f32.gmra.mrb[0].mxu0 %v659
    %v727 = vpop.f32.mrb[0].mxu0
    %v728 = vadd.f32 0.0, %v727
    %v729 = vpop.f32.mrb[0].mxu0
    %730 = vdwg.mxu0
    %v731 = vadd.f32 %v196, %v728
    %v732 = vtanh.pop %v731
    %v734 = vsel %vm74, %v732, 0
    %736 = vmatprep.subr.mxu0 0.0
    %737 = vmatpush1.msra.mxu0 %v204
    %738 = vmatprep.subr.mxu0 0.0
    %739 = vmatpush1.msra.mxu0 %v205
    %740 = vmatprep.subr.mxu0 0.0
    %741 = vmatpush1.msra.mxu0 %v206
    %742 = vmatprep.subr.mxu0 0.0
    %743 = vmatpush1.msra.mxu0 %v207
    %744 = vmatprep.subr.mxu0 0.0
    %745 = vmatpush1.msra.mxu0 0.0
    %746 = vmatprep.subr.mxu0 0.0
    %747 = vmatpush1.msra.mxu0 0.0
    %748 = vmatprep.subr.mxu0 0.0
    %749 = vmatpush1.msra.mxu0 0.0
    %750 = vmatprep.subr.mxu0 0.0
    %751 = vmatpush1.msra.mxu0 0.0
    %752 = vmatprep.subr.mxu0 0.0
    %753 = vmatpush1.msra.mxu0 0.0
    %754 = vmatprep.subr.mxu0 0.0
    %755 = vmatpush1.msra.mxu0 0.0
    %756 = vmatprep.subr.mxu0 0.0
    %757 = vmatpush1.msra.mxu0 0.0
    %758 = vmatprep.subr.mxu0 0.0
    %759 = vmatpush1.msra.mxu0 0.0
    %760 = vmatprep.subr.mxu0 0.0
    %761 = vmatpush1.msra.mxu0 0.0
    %762 = vmatprep.subr.mxu0 0.0
    %763 = vmatpush1.msra.mxu0 0.0
    %764 = vmatprep.subr.mxu0 0.0
    %765 = vmatpush1.msra.mxu0 0.0
    %766 = vmatprep.subr.mxu0 0.0
    %767 = vmatpush1.msra.mxu0 0.0
    %768 = vmatprep.subr.mxu0 0.0
    %769 = vmatpush1.msra.mxu0 0.0
    %770 = vmatprep.subr.mxu0 0.0
    %771 = vmatpush1.msra.mxu0 0.0
    %772 = vmatprep.subr.mxu0 0.0
    %773 = vmatpush1.msra.mxu0 0.0
    %774 = vmatprep.subr.mxu0 0.0
    %775 = vmatpush1.msra.mxu0 0.0
    %776 = vmatprep.subr.mxu0 0.0
    %777 = vmatpush1.msra.mxu0 0.0
    %778 = vmatprep.subr.mxu0 0.0
    %779 = vmatpush1.msra.mxu0 0.0
    %780 = vmatprep.subr.mxu0 0.0
    %781 = vmatpush1.msra.mxu0 0.0
    %782 = vmatprep.subr.mxu0 0.0
    %783 = vmatpush1.msra.mxu0 0.0
    %784 = vmatprep.subr.mxu0 0.0
    %785 = vmatpush1.msra.mxu0 0.0
    %786 = vmatprep.subr.mxu0 0.0
    %787 = vmatpush1.msra.mxu0 0.0
    %788 = vmatprep.subr.mxu0 0.0
    %789 = vmatpush1.msra.mxu0 0.0
    %790 = vmatprep.subr.mxu0 0.0
    %791 = vmatpush1.msra.mxu0 0.0
    %792 = vmatprep.subr.mxu0 0.0
    %793 = vmatpush1.msra.mxu0 0.0
    %794 = vmatprep.subr.mxu0 0.0
    %795 = vmatpush1.msra.mxu0 0.0
    %796 = vmatprep.subr.mxu0 0.0
    %797 = vmatpush1.msra.mxu0 0.0
    %798 = vmatprep.subr.mxu0 0.0
    %799 = vmatpush1.msra.mxu0 0.0
    %800 = vmatprep.mubr.f32.mxu0 0.0
    %801 = vmatmul.mubr.f32.gmra.mrb[0].mxu0 %v734
    %v802 = vpop.f32.mrb[0].mxu0
    %v803 = vadd.f32 0.0, %v802
    %v804 = vpop.f32.mrb[0].mxu0
    %805 = vdwg.mxu0
    %v806 = vadd.f32 %v201, %v803
    %v807 = vtanh.pop %v806
    %v808 = vld [vmem:[%s1 + $0x40] sm:$0xff]
    %v809 = vld [vmem:[%s1 + $0x48] sm:$0xff]
    %v810 = vld [vmem:[%s1 + $0x50] sm:$0xff]
    %v811 = vld [vmem:[%s1 + $0x58] sm:$0xff]
    %v812 = vld [vmem:[%s1 + $0xa0] sm:$0x1]
    %v813 = vlaneseq
    %v814 = vshrl.u32 %v813, 7
    %v815 = vsub.s32 0, %v814
    %v816 = vrot.slane %v812, %v815
    %v818 = vsel %vm74, %v807, 0
    %820 = vmatprep.subr.mxu0 0.0
    %821 = vmatpush1.msra.mxu0 %v808
    %822 = vmatprep.subr.mxu0 0.0
    %823 = vmatpush1.msra.mxu0 %v809
    %824 = vmatprep.subr.mxu0 0.0
    %825 = vmatpush1.msra.mxu0 %v810
    %826 = vmatprep.subr.mxu0 0.0
    %827 = vmatpush1.msra.mxu0 %v811
    %828 = vmatprep.subr.mxu0 0.0
    %829 = vmatpush1.msra.mxu0 0.0
    %830 = vmatprep.subr.mxu0 0.0
    %831 = vmatpush1.msra.mxu0 0.0
    %832 = vmatprep.subr.mxu0 0.0
    %833 = vmatpush1.msra.mxu0 0.0
    %834 = vmatprep.subr.mxu0 0.0
    %835 = vmatpush1.msra.mxu0 0.0
    %836 = vmatprep.subr.mxu0 0.0
    %837 = vmatpush1.msra.mxu0 0.0
    %838 = vmatprep.subr.mxu0 0.0
    %839 = vmatpush1.msra.mxu0 0.0
    %840 = vmatprep.subr.mxu0 0.0
    %841 = vmatpush1.msra.mxu0 0.0
    %842 = vmatprep.subr.mxu0 0.0
    %843 = vmatpush1.msra.mxu0 0.0
    %844 = vmatprep.subr.mxu0 0.0
    %845 = vmatpush1.msra.mxu0 0.0
    %846 = vmatprep.subr.mxu0 0.0
    %847 = vmatpush1.msra.mxu0 0.0
    %848 = vmatprep.subr.mxu0 0.0
    %849 = vmatpush1.msra.mxu0 0.0
    %850 = vmatprep.subr.mxu0 0.0
    %851 = vmatpush1.msra.mxu0 0.0
    %852 = vmatprep.subr.mxu0 0.0
    %853 = vmatpush1.msra.mxu0 0.0
    %854 = vmatprep.subr.mxu0 0.0
    %855 = vmatpush1.msra.mxu0 0.0
    %856 = vmatprep.subr.mxu0 0.0
    %857 = vmatpush1.msra.mxu0 0.0
    %858 = vmatprep.subr.mxu0 0.0
    %859 = vmatpush1.msra.mxu0 0.0
    %860 = vmatprep.subr.mxu0 0.0
    %861 = vmatpush1.msra.mxu0 0.0
    %862 = vmatprep.subr.mxu0 0.0
    %863 = vmatpush1.msra.mxu0 0.0
    %864 = vmatprep.subr.mxu0 0.0
    %865 = vmatpush1.msra.mxu0 0.0
    %866 = vmatprep.subr.mxu0 0.0
    %867 = vmatpush1.msra.mxu0 0.0
    %868 = vmatprep.subr.mxu0 0.0
    %869 = vmatpush1.msra.mxu0 0.0
    %870 = vmatprep.subr.mxu0 0.0
    %871 = vmatpush1.msra.mxu0 0.0
    %872 = vmatprep.subr.mxu0 0.0
    %873 = vmatpush1.msra.mxu0 0.0
    %874 = vmatprep.subr.mxu0 0.0
    %875 = vmatpush1.msra.mxu0 0.0
    %876 = vmatprep.subr.mxu0 0.0
    %877 = vmatpush1.msra.mxu0 0.0
    %878 = vmatprep.subr.mxu0 0.0
    %879 = vmatpush1.msra.mxu0 0.0
    %880 = vmatprep.subr.mxu0 0.0
    %881 = vmatpush1.msra.mxu0 0.0
    %882 = vmatprep.subr.mxu0 0.0
    %883 = vmatpush1.msra.mxu0 0.0
    %884 = vmatprep.mubr.f32.mxu0 0.0
    %885 = vmatmul.mubr.f32.gmra.mrb[0].mxu0 %v818
    %v886 = vpop.f32.mrb[0].mxu0
    %v887 = vadd.f32 %v816, %v886
    %v888 = vpop.f32.mrb[0].mxu0
    %889 = vdwg.mxu0
    %v890 = vmax.f32 %v887, 0.0
    %v891 = vld [vmem:[%s1 + $0xa1] sm:$0x1]
    %v892 = vld [vmem:[%s1 + $0xa2] sm:$0x1]
    %v893 = vsel %vm74, %v890, 0.0
    %894 = vadd.xlane.f32.xlu0 %v893
    %v895 = vpop.xlane.xlu0 %894
    %v896 = vrcp.pop 32.0
    %v897 = vmul.f32 %v895, %v896
    %v898 = vmul.f32 %v890, %v890
    %v899 = vsel %vm74, %v898, 0.0
    %900 = vadd.xlane.f32.xlu0 %v899
    %v901 = vpop.xlane.xlu0 %900
    %v902 = vmul.f32 %v901, %v896
    %v903 = vmul.f32 %v897, %v897
    %v904 = vsub.f32 %v902, %v903
    %v905 = vsub.f32 %v890, %v897
    %v906 = vadd.f32 %v904, 1e-05
    %v907 = vrsqrt.pop %v906
    %v908 = vmul.f32 %v905, %v907
    %v909 = vlaneseq
    %v910 = vshrl.u32 %v909, 7
    %v911 = vsub.s32 0, %v910
    %v912 = vrot.slane %v891, %v911
    %v913 = vmul.f32 %v908, %v912
    %v914 = vlaneseq
    %v915 = vshrl.u32 %v914, 7
    %v916 = vsub.s32 0, %v915
    %v917 = vrot.slane %v892, %v916
    %v918 = vadd.f32 %v913, %v917
    %v919 = vld [vmem:[%s1 + $0x60] sm:$0xff]
    %v920 = vld [vmem:[%s1 + $0x68] sm:$0xff]
    %v921 = vld [vmem:[%s1 + $0x70] sm:$0xff]
    %v922 = vld [vmem:[%s1 + $0x78] sm:$0xff]
    %v923 = vld [vmem:[%s1 + $0xa3] sm:$0x1]
    %v924 = vlaneseq
    %v925 = vshrl.u32 %v924, 7
    %v926 = vsub.s32 0, %v925
    %v927 = vrot.slane %v923, %v926
    %v929 = vsel %vm74, %v918, 0
    %931 = vmatprep.subr.mxu0 0.0
    %932 = vmatpush1.msra.mxu0 %v919
    %933 = vmatprep.subr.mxu0 0.0
    %934 = vmatpush1.msra.mxu0 %v920
    %935 = vmatprep.subr.mxu0 0.0
    %936 = vmatpush1.msra.mxu0 %v921
    %937 = vmatprep.subr.mxu0 0.0
    %938 = vmatpush1.msra.mxu0 %v922
    %939 = vmatprep.subr.mxu0 0.0
    %940 = vmatpush1.msra.mxu0 0.0
    %941 = vmatprep.subr.mxu0 0.0
    %942 = vmatpush1.msra.mxu0 0.0
    %943 = vmatprep.subr.mxu0 0.0
    %944 = vmatpush1.msra.mxu0 0.0
    %945 = vmatprep.subr.mxu0 0.0
    %946 = vmatpush1.msra.mxu0 0.0
    %947 = vmatprep.subr.mxu0 0.0
    %948 = vmatpush1.msra.mxu0 0.0
    %949 = vmatprep.subr.mxu0 0.0
    %950 = vmatpush1.msra.mxu0 0.0
    %951 = vmatprep.subr.mxu0 0.0
    %952 = vmatpush1.msra.mxu0 0.0
    %953 = vmatprep.subr.mxu0 0.0
    %954 = vmatpush1.msra.mxu0 0.0
    %955 = vmatprep.subr.mxu0 0.0
    %956 = vmatpush1.msra.mxu0 0.0
    %957 = vmatprep.subr.mxu0 0.0
    %958 = vmatpush1.msra.mxu0 0.0
    %959 = vmatprep.subr.mxu0 0.0
    %960 = vmatpush1.msra.mxu0 0.0
    %961 = vmatprep.subr.mxu0 0.0
    %962 = vmatpush1.msra.mxu0 0.0
    %963 = vmatprep.subr.mxu0 0.0
    %964 = vmatpush1.msra.mxu0 0.0
    %965 = vmatprep.subr.mxu0 0.0
    %966 = vmatpush1.msra.mxu0 0.0
    %967 = vmatprep.subr.mxu0 0.0
    %968 = vmatpush1.msra.mxu0 0.0
    %969 = vmatprep.subr.mxu0 0.0
    %970 = vmatpush1.msra.mxu0 0.0
    %971 = vmatprep.subr.mxu0 0.0
    %972 = vmatpush1.msra.mxu0 0.0
    %973 = vmatprep.subr.mxu0 0.0
    %974 = vmatpush1.msra.mxu0 0.0
    %975 = vmatprep.subr.mxu0 0.0
    %976 = vmatpush1.msra.mxu0 0.0
    %977 = vmatprep.subr.mxu0 0.0
    %978 = vmatpush1.msra.mxu0 0.0
    %979 = vmatprep.subr.mxu0 0.0
    %980 = vmatpush1.msra.mxu0 0.0
    %981 = vmatprep.subr.mxu0 0.0
    %982 = vmatpush1.msra.mxu0 0.0
    %983 = vmatprep.subr.mxu0 0.0
    %984 = vmatpush1.msra.mxu0 0.0
    %985 = vmatprep.subr.mxu0 0.0
    %986 = vmatpush1.msra.mxu0 0.0
    %987 = vmatprep.subr.mxu0 0.0
    %988 = vmatpush1.msra.mxu0 0.0
    %989 = vmatprep.subr.mxu0 0.0
    %990 = vmatpush1.msra.mxu0 0.0
    %991 = vmatprep.subr.mxu0 0.0
    %992 = vmatpush1.msra.mxu0 0.0
    %993 = vmatprep.subr.mxu0 0.0
    %994 = vmatpush1.msra.mxu0 0.0
    %995 = vmatprep.mubr.f32.mxu0 0.0
    %996 = vmatmul.mubr.f32.gmra.mrb[0].mxu0 %v929
    %v997 = vpop.f32.mrb[0].mxu0
    %v998 = vadd.f32 %v927, %v997
    %v999 = vpop.f32.mrb[0].mxu0
    %1000 = vdwg.mxu0
    %v1001 = vmax.f32 %v998, 0.0
    %v1002 = vld [vmem:[%s1 + $0xa4] sm:$0x1]
    %v1003 = vld [vmem:[%s1 + $0xa5] sm:$0x1]
    %v1004 = vsel %vm74, %v1001, 0.0
    %1005 = vadd.xlane.f32.xlu0 %v1004
    %v1006 = vpop.xlane.xlu0 %1005
    %v1007 = vmul.f32 %v1006, %v896
    %v1008 = vmul.f32 %v1001, %v1001
    %v1009 = vsel %vm74, %v1008, 0.0
    %1010 = vadd.xlane.f32.xlu0 %v1009
    %v1011 = vpop.xlane.xlu0 %1010
    %v1012 = vmul.f32 %v1011, %v896
    %v1013 = vmul.f32 %v1007, %v1007
    %v1014 = vsub.f32 %v1012, %v1013
    %v1015 = vsub.f32 %v1001, %v1007
    %v1016 = vadd.f32 %v1014, 1e-05
    %v1017 = vrsqrt.pop %v1016
    %v1018 = vmul.f32 %v1015, %v1017
    %v1019 = vlaneseq
    %v1020 = vshrl.u32 %v1019, 7
    %v1021 = vsub.s32 0, %v1020
    %v1022 = vrot.slane %v1002, %v1021
    %v1023 = vmul.f32 %v1018, %v1022
    %v1024 = vlaneseq
    %v1025 = vshrl.u32 %v1024, 7
    %v1026 = vsub.s32 0, %v1025
    %v1027 = vrot.slane %v1003, %v1026
    %v1028 = vadd.f32 %v1023, %v1027
    %v1029 = vld [vmem:[%s1 + $0x80] sm:$0xff]
    %v1030 = vld [vmem:[%s1 + $0x88] sm:$0xff]
    %v1031 = vld [vmem:[%s1 + $0x90] sm:$0xff]
    %v1032 = vld [vmem:[%s1 + $0x98] sm:$0xff]
    %v1033 = vld [vmem:[%s1 + $0xa6] sm:$0x1]
    %v1034 = vlaneseq
    %v1035 = vshrl.u32 %v1034, 7
    %v1036 = vsub.s32 0, %v1035
    %v1037 = vrot.slane %v1033, %v1036
    %v1039 = vsel %vm74, %v1028, 0
    %1041 = vmatprep.subr.mxu0 0.0
    %1042 = vmatpush1.msra.mxu0 %v1029
    %1043 = vmatprep.subr.mxu0 0.0
    %1044 = vmatpush1.msra.mxu0 %v1030
    %1045 = vmatprep.subr.mxu0 0.0
    %1046 = vmatpush1.msra.mxu0 %v1031
    %1047 = vmatprep.subr.mxu0 0.0
    %1048 = vmatpush1.msra.mxu0 %v1032
    %1049 = vmatprep.subr.mxu0 0.0
    %1050 = vmatpush1.msra.mxu0 0.0
    %1051 = vmatprep.subr.mxu0 0.0
    %1052 = vmatpush1.msra.mxu0 0.0
    %1053 = vmatprep.subr.mxu0 0.0
    %1054 = vmatpush1.msra.mxu0 0.0
    %1055 = vmatprep.subr.mxu0 0.0
    %1056 = vmatpush1.msra.mxu0 0.0
    %1057 = vmatprep.subr.mxu0 0.0
    %1058 = vmatpush1.msra.mxu0 0.0
    %1059 = vmatprep.subr.mxu0 0.0
    %1060 = vmatpush1.msra.mxu0 0.0
    %1061 = vmatprep.subr.mxu0 0.0
    %1062 = vmatpush1.msra.mxu0 0.0
    %1063 = vmatprep.subr.mxu0 0.0
    %1064 = vmatpush1.msra.mxu0 0.0
    %1065 = vmatprep.subr.mxu0 0.0
    %1066 = vmatpush1.msra.mxu0 0.0
    %1067 = vmatprep.subr.mxu0 0.0
    %1068 = vmatpush1.msra.mxu0 0.0
    %1069 = vmatprep.subr.mxu0 0.0
    %1070 = vmatpush1.msra.mxu0 0.0
    %1071 = vmatprep.subr.mxu0 0.0
    %1072 = vmatpush1.msra.mxu0 0.0
    %1073 = vmatprep.subr.mxu0 0.0
    %1074 = vmatpush1.msra.mxu0 0.0
    %1075 = vmatprep.subr.mxu0 0.0
    %1076 = vmatpush1.msra.mxu0 0.0
    %1077 = vmatprep.subr.mxu0 0.0
    %1078 = vmatpush1.msra.mxu0 0.0
    %1079 = vmatprep.subr.mxu0 0.0
    %1080 = vmatpush1.msra.mxu0 0.0
    %1081 = vmatprep.subr.mxu0 0.0
    %1082 = vmatpush1.msra.mxu0 0.0
    %1083 = vmatprep.subr.mxu0 0.0
    %1084 = vmatpush1.msra.mxu0 0.0
    %1085 = vmatprep.subr.mxu0 0.0
    %1086 = vmatpush1.msra.mxu0 0.0
    %1087 = vmatprep.subr.mxu0 0.0
    %1088 = vmatpush1.msra.mxu0 0.0
    %1089 = vmatprep.subr.mxu0 0.0
    %1090 = vmatpush1.msra.mxu0 0.0
    %1091 = vmatprep.subr.mxu0 0.0
    %1092 = vmatpush1.msra.mxu0 0.0
    %1093 = vmatprep.subr.mxu0 0.0
    %1094 = vmatpush1.msra.mxu0 0.0
    %1095 = vmatprep.subr.mxu0 0.0
    %1096 = vmatpush1.msra.mxu0 0.0
    %1097 = vmatprep.subr.mxu0 0.0
    %1098 = vmatpush1.msra.mxu0 0.0
    %1099 = vmatprep.subr.mxu0 0.0
    %1100 = vmatpush1.msra.mxu0 0.0
    %1101 = vmatprep.subr.mxu0 0.0
    %1102 = vmatpush1.msra.mxu0 0.0
    %1103 = vmatprep.subr.mxu0 0.0
    %1104 = vmatpush1.msra.mxu0 0.0
    %1105 = vmatprep.mubr.f32.mxu0 0.0
    %1106 = vmatmul.mubr.f32.gmra.mrb[0].mxu0 %v1039
    %v1107 = vpop.f32.mrb[0].mxu0
    %v1108 = vadd.f32 %v1037, %v1107
    %v1109 = vpop.f32.mrb[0].mxu0
    %1110 = vdwg.mxu0
    %1111 = vst [vmem:[#allocation2] sm:$0xff] %v1108
    // Predicated region
    $region10: #{rnn_tower_forward.1} parent=1 // pred_check
      _
    $region11: #{rnn_tower_forward.1} parent=1 // pred_check_branch
      %1113 = sbr.rel (0) target = $region13
    $region12: #{rnn_tower_forward.1} parent=1 // pred_region
      %s1115 = ssub.s32 128, 128
      %1116 = vsyncadd [#allocation3], %s1115
      %s1118 = sshll.u32 [#allocation2], 4
      %s1119 = int_to_ptr.vmem [resolvable:$true] %s1118
      %1121 = dma.vmem_to_hbm [thread:$0]  %s1119, 128, %s2, [#allocation3]
    $region13: #{rnn_tower_forward.1} parent=1 // pred_fallthru
      _
    // Predicated region
    $region14: #{rnn_tower_forward.1} parent=1 // pred_check
      _
    $region15: #{rnn_tower_forward.1} parent=1 // pred_check_branch
      %1123 = sbr.rel (0) target = $region17
    $region16: #{rnn_tower_forward.1} parent=1 // pred_region
      %1124 = dma.done [#allocation3], 128
    $region17: #{rnn_tower_forward.1} parent=1 // pred_fallthru
      _
    %1125 = vsyncpa [#allocation3], 1

</llo_original>
